<compile_context>
chip_gen: v5e
topology: v5e:2x2
jax: 0.10.0
libtpu: 0.0.40
codegen_flags: <defaults>
</compile_context>

<pallas_src>
import jax
import jax.numpy as jnp
from jax.experimental import pallas as pl
from jax.experimental.pallas import tpu as pltpu

MASK_FILL = -1e10          # Python literal -> jaxpr constant (torch uses -1e10)

_PIPE_BUDGET_BYTES = 12 * 1024 * 1024   # double-buffered x/mask/out tiles; fits
                                        # v7x 32 MiB scoped / 64 MiB physical VMEM
_VMEM_LIMIT_BYTES = 32 * 1024 * 1024
_SMALL_N = 4096                          # below this: single block (overhead-bound)


def _round_up(x, m):
    return -(-x // m) * m


def _choose_rows(n, g, row_bytes):
    """Row tile in *original* rows.

    Small N: one block (block dims == full array dims, no alignment needed).
    Large N: a multiple of 32*g (keeps packed block rows a multiple of 8 and
    sublane-friendly), sized from the VMEM pipeline budget and capped near N/2
    so the 'parallel' grid axis has >= 2 steps for v7x's two TensorCores.
    """
    if n <= _SMALL_N:
        return n
    align = 32 * g
    budget = max(align, (_PIPE_BUDGET_BYTES // max(row_bytes, 1)) // align * align)
    half = _round_up(pl.cdiv(n, 2), align)
    return max(align, min(budget, half))


# ----------------------------- kernels --------------------------------------
# The same two bodies serve the packed and the fallback layouts; only the tile
# shapes differ.  The weight arrives already laid out (K, out_cols), so the MXU
# contraction needs no per-step transpose.

def _masked_kernel(x_ref, w_ref, b_ref, m_ref, o_ref):
    logits = jnp.dot(x_ref[...], w_ref[...], preferred_element_type=jnp.float32)
    logits = logits + b_ref[...]                       # (1, C) broadcast over rows
    o_ref[...] = jnp.where(m_ref[...] != 0, logits, MASK_FILL).astype(o_ref.dtype)


def _unmasked_kernel(x_ref, w_ref, b_ref, o_ref):
    logits = jnp.dot(x_ref[...], w_ref[...], preferred_element_type=jnp.float32)
    o_ref[...] = (logits + b_ref[...]).astype(o_ref.dtype)


def _launch(x2, w2, b2, m2, tile_rows, out_dtype, flops):
    rows, in_cols = x2.shape
    out_cols = w2.shape[1]
    grid = (pl.cdiv(rows, tile_rows),)          # ragged last block handled by Pallas

    x_spec = pl.BlockSpec((tile_rows, in_cols), lambda i: (i, 0))
    w_spec = pl.BlockSpec(w2.shape, lambda i: (0, 0))       # VMEM-resident weight
    b_spec = pl.BlockSpec((1, out_cols), lambda i: (0, 0))  # VMEM-resident bias
    o_spec = pl.BlockSpec((tile_rows, out_cols), lambda i: (i, 0))

    out_itemsize = jnp.result_type(out_dtype).itemsize
    bytes_accessed = (x2.size * x2.dtype.itemsize
                      + w2.size * w2.dtype.itemsize
                      + b2.size * b2.dtype.itemsize
                      + (m2.size * m2.dtype.itemsize if m2 is not None else 0)
                      + rows * out_cols * out_itemsize)
    cost = pl.CostEstimate(flops=int(flops), transcendentals=0,
                           bytes_accessed=int(bytes_accessed))

    params = pltpu.CompilerParams(
        dimension_semantics=("parallel",),      # rows shard across v7x's 2 TCs
        vmem_limit_bytes=_VMEM_LIMIT_BYTES,
    )
    out_shape = jax.ShapeDtypeStruct((rows, out_cols), out_dtype)

    if m2 is None:
        return pl.pallas_call(
            _unmasked_kernel, out_shape=out_shape, grid=grid,
            in_specs=[x_spec, w_spec, b_spec], out_specs=o_spec,
            compiler_params=params, cost_estimate=cost,
        )(x2, w2, b2)

    m_spec = pl.BlockSpec((tile_rows, out_cols), lambda i: (i, 0))
    return pl.pallas_call(
        _masked_kernel, out_shape=out_shape, grid=grid,
        in_specs=[x_spec, w_spec, b_spec, m_spec], out_specs=o_spec,
        compiler_params=params, cost_estimate=cost,
    )(x2, w2, b2, m2)


@jax.jit
def _policy_logit_tail(x, weight, bias, mask):
    n, f = x.shape
    a = weight.shape[0]
    out_dtype = jnp.result_type(x.dtype, weight.dtype)
    mask_bytes = mask.dtype.itemsize if mask is not None else 0
    # Double-buffered pipeline bytes per original row (x + out + mask tiles).
    row_bytes = 2 * (f * x.dtype.itemsize + a * out_dtype.itemsize + a * mask_bytes)

    wt = weight.T                               # (F, A): tiny one-time transform

    g = 128 // a if (0 < a <= 128 and 128 % a == 0) else 1
    if g > 1 and n % g == 0:
        # ---- lane-dense packed layout: g original rows per 128-lane slab ----
        rows = n // g
        x_p = x.reshape(rows, g * f)            # free row-major bitcast view
        m_p = mask.reshape(rows, g * a) if mask is not None else None
        w_big = jnp.kron(jnp.eye(g, dtype=wt.dtype), wt)   # (g*F, 128) block-diag
        b_big = jnp.tile(bias, g).reshape(1, g * a)        # (1, 128)
        tm = _choose_rows(n, g, row_bytes)      # multiple of 32*g (or == n)
        flops = 2 * rows * (g * f) * (g * a)
        out = _launch(x_p, w_big, b_big, m_p, tm // g, out_dtype, flops)
        return out.reshape(n, a)                # free bitcast back to (N, A)

    # ---- general fallback (A doesn't pack into 128 lanes, or N % g != 0) ----
    b2 = bias.reshape(1, a)
    tm = _choose_rows(n, 1, row_bytes)
    flops = 2 * n * f * a
    return _launch(x, wt, b2, mask, tm, out_dtype, flops)


def policy_logit_tail(x, weight, bias, mask=None):
    """x: (N, F); weight: (A, F) (PyTorch nn.Linear layout); bias: (A,);
    mask: optional (N, A) of any bool/int dtype (nonzero == keep).
    Returns (N, A) logits."""
    assert x.ndim == 2, f"expected 2D input (N, F), got {x.shape}"
    return _policy_logit_tail(x, weight, bias, mask)


def _reference(x, weight, bias, mask):
    logits = x @ weight.T + bias
    if mask is not None:
        logits = jnp.where(mask != 0, logits, MASK_FILL)
    return logits


if __name__ == "__main__":
    key = jax.random.PRNGKey(0)
    kx, kw, kb, km, kx2, kw2, kb2, km2, kx3, km3 = jax.random.split(key, 10)

    # ---- Case 1: small shapes from the module (packed lane-dense path) -----
    N, F, A = 8, 32, 16
    bound = 1.0 / float(F) ** 0.5
    x = jax.random.normal(kx, (N, F), dtype=jnp.float32)
    weight = jax.random.uniform(kw, (A, F), minval=-bound, maxval=bound,
                                dtype=jnp.float32)
    bias = jax.random.uniform(kb, (A,), minval=-bound, maxval=bound,
                              dtype=jnp.float32)
    mask = jax.random.bernoulli(km, p=0.7, shape=(N, A)).astype(jnp.int32)

    out = policy_logit_tail(x, weight, bias, mask)
    jax.block_until_ready(out)
    assert out.shape == (N, A)
    assert jnp.allclose(out, _reference(x, weight, bias, mask),
                        atol=1e-3, rtol=1e-3), "masked packed mismatch"

    out_nm = policy_logit_tail(x, weight, bias, None)
    jax.block_until_ready(out_nm)
    assert jnp.allclose(out_nm, _reference(x, weight, bias, None),
                        atol=1e-3, rtol=1e-3), "unmasked packed mismatch"

    # ---- Case 2: multi-step grid with a ragged last block (packed path) ----
    N2 = 5000
    x2 = jax.random.normal(kx3, (N2, F), dtype=jnp.float32)
    mask2 = jax.random.bernoulli(km3, p=0.7, shape=(N2, A)).astype(jnp.int32)
    out2 = policy_logit_tail(x2, weight, bias, mask2)
    jax.block_until_ready(out2)
    assert jnp.allclose(out2, _reference(x2, weight, bias, mask2),
                        atol=1e-3, rtol=1e-3), "ragged multi-block mismatch"

    # ---- Case 3: fallback path (A does not divide 128) ----------------------
    A3, N3 = 20, 8
    x3 = jax.random.normal(kx2, (N3, F), dtype=jnp.float32)
    w3 = jax.random.uniform(kw2, (A3, F), minval=-bound, maxval=bound,
                            dtype=jnp.float32)
    b3 = jax.random.uniform(kb2, (A3,), minval=-bound, maxval=bound,
                            dtype=jnp.float32)
    m3 = jax.random.bernoulli(km2, p=0.7, shape=(N3, A3)).astype(jnp.int32)
    out3 = policy_logit_tail(x3, w3, b3, m3)
    jax.block_until_ready(out3)
    assert jnp.allclose(out3, _reference(x3, w3, b3, m3),
                        atol=1e-3, rtol=1e-3), "fallback mismatch"

    print("KERNEL_OK")
</pallas_src>

<mosaic_0001>
module attributes {stable_mosaic.version = 11 : i64} {
  func.func @_masked_kernel(%arg0: i32, %arg1: memref<1x256xf32, #tpu.memory_space<vmem>>, %arg2: memref<256x128xf32, #tpu.memory_space<vmem>>, %arg3: memref<1x128xf32, #tpu.memory_space<vmem>>, %arg4: memref<1x128xi32, #tpu.memory_space<vmem>>, %arg5: memref<1x128xf32, #tpu.memory_space<vmem>>) attributes {dimension_semantics = [#tpu.dimension_semantics<parallel>], iteration_bounds = array<i64: 1>, scalar_prefetch = 0 : i64, scratch_operands = 0 : i64, tpu.core_type = #tpu.core_type<tc>, window_params = [{transform_indices = @transform_0, window_bounds = array<i64: 1, 256>}, {pipeline_mode = #tpu.pipeline_mode<synchronous>, transform_indices = @transform_1, window_bounds = array<i64: 256, 128>}, {pipeline_mode = #tpu.pipeline_mode<synchronous>, transform_indices = @transform_2, window_bounds = array<i64: 1, 128>}, {transform_indices = @transform_3, window_bounds = array<i64: 1, 128>}, {transform_indices = @transform_4, window_bounds = array<i64: 1, 128>}]} {
    %c0 = arith.constant 0 : index
    %c0_0 = arith.constant 0 : index
    %0 = vector.load %arg1[%c0, %c0_0] : memref<1x256xf32, #tpu.memory_space<vmem>>, vector<1x256xf32>
    %c0_1 = arith.constant 0 : index
    %c0_2 = arith.constant 0 : index
    %1 = vector.load %arg2[%c0_1, %c0_2] : memref<256x128xf32, #tpu.memory_space<vmem>>, vector<256x128xf32>
    %cst = arith.constant dense<0.000000e+00> : vector<1x128xf32>
    %2 = tpu.matmul %0, %1, %cst {dimension_numbers = #tpu.dot_dimension_numbers<[1], [0], [0], [1], [0, 0, 1, 1], [], []>} : vector<1x256xf32>, vector<256x128xf32>, vector<1x128xf32> -> vector<1x128xf32>
    %c0_3 = arith.constant 0 : index
    %c0_4 = arith.constant 0 : index
    %3 = vector.load %arg3[%c0_3, %c0_4] : memref<1x128xf32, #tpu.memory_space<vmem>>, vector<1x128xf32>
    %4 = arith.addf %2, %3 : vector<1x128xf32>
    %c0_5 = arith.constant 0 : index
    %c0_6 = arith.constant 0 : index
    %5 = vector.load %arg4[%c0_5, %c0_6] : memref<1x128xi32, #tpu.memory_space<vmem>>, vector<1x128xi32>
    %c0_i32 = arith.constant 0 : i32
    %6 = vector.broadcast %c0_i32 : i32 to vector<1x128xi32>
    %7 = arith.cmpi ne, %5, %6 : vector<1x128xi32>
    %cst_7 = arith.constant -1.000000e+10 : f32
    %8 = vector.broadcast %cst_7 : f32 to vector<1x128xf32>
    %9 = arith.select %7, %4, %8 : vector<1x128xi1>, vector<1x128xf32>
    %c0_8 = arith.constant 0 : index
    %c0_9 = arith.constant 0 : index
    %10 = vector.load %arg5[%c0_8, %c0_9] : memref<1x128xf32, #tpu.memory_space<vmem>>, vector<1x128xf32>
    tpu.vector_store %arg5[%c0_8, %c0_9], %9 {strides = array<i32>} : memref<1x128xf32, #tpu.memory_space<vmem>>, vector<1x128xf32>,
    return
  }
  func.func @transform_0(%arg0: i32) -> (i32, i32) {
    %c0_i32 = arith.constant 0 : i32
    %c0_i32_0 = arith.constant 0 : i32
    return %arg0, %c0_i32 : i32, i32
  }
  func.func @transform_1(%arg0: i32) -> (i32, i32) {
    %c0_i32 = arith.constant 0 : i32
    %c0_i32_0 = arith.constant 0 : i32
    %c0_i32_1 = arith.constant 0 : i32
    return %c0_i32, %c0_i32_0 : i32, i32
  }
  func.func @transform_2(%arg0: i32) -> (i32, i32) {
    %c0_i32 = arith.constant 0 : i32
    %c0_i32_0 = arith.constant 0 : i32
    %c0_i32_1 = arith.constant 0 : i32
    return %c0_i32, %c0_i32_0 : i32, i32
  }
  func.func @transform_3(%arg0: i32) -> (i32, i32) {
    %c0_i32 = arith.constant 0 : i32
    %c0_i32_0 = arith.constant 0 : i32
    return %arg0, %c0_i32 : i32, i32
  }
  func.func @transform_4(%arg0: i32) -> (i32, i32) {
    %c0_i32 = arith.constant 0 : i32
    %c0_i32_0 = arith.constant 0 : i32
    return %arg0, %c0_i32 : i32, i32
  }
}

</mosaic_0001>

<llo_original>
// kernel: tile.9
$region0: #{tile.9}
  %s0 = inlined_call_operand.vmem [shape: f32[8,16], index: 0, kind: input, shape index: {}]
  %s1 = inlined_call_operand.vmem [shape: f32[1,128], index: 1, kind: output, shape index: {}]
  $region1: #{tile.9} parent=0
    #allocation0 [shape = 'u8[4096]{0}', space=vmem, size = 0x1000, scoped, tag = 'scoped mem for output reshape']
    %v2 = vld [vmem:[%s0] sm:$0x1]
    %vm3 = vcmask 130048
    %4 = vst.msk [vmem:[#allocation0] sm:$0x1] %vm3, %v2
    %s5 = scalar_lea.vmem %s0, 7
    %v6 = vld [vmem:[%s5] sm:$0x1]
    %7 = vrot.lane.b32.xlu0 %v6, 112
    %v8 = vpop.permute.xlu0 %7
    %vm9 = vcmask 1048448
    %10 = vst.msk [vmem:[#allocation0] sm:$0x1] %vm9, %v8
    %s11 = scalar_lea.vmem %s0, 6
    %v12 = vld [vmem:[%s11] sm:$0x1]
    %13 = vrot.lane.b32.xlu0 %v12, 96
    %v14 = vpop.permute.xlu0 %13
    %vm15 = vcmask 917248
    %16 = vst.msk [vmem:[#allocation0] sm:$0x1] %vm15, %v14
    %s17 = scalar_lea.vmem %s0, 5
    %v18 = vld [vmem:[%s17] sm:$0x1]
    %19 = vrot.lane.b32.xlu0 %v18, 80
    %v20 = vpop.permute.xlu0 %19
    %vm21 = vcmask 786048
    %22 = vst.msk [vmem:[#allocation0] sm:$0x1] %vm21, %v20
    %s23 = scalar_lea.vmem %s0, 4
    %v24 = vld [vmem:[%s23] sm:$0x1]
    %25 = vrot.lane.b32.xlu0 %v24, 64
    %v26 = vpop.permute.xlu0 %25
    %vm27 = vcmask 654848
    %28 = vst.msk [vmem:[#allocation0] sm:$0x1] %vm27, %v26
    %s29 = scalar_lea.vmem %s0, 3
    %v30 = vld [vmem:[%s29] sm:$0x1]
    %31 = vrot.lane.b32.xlu0 %v30, 48
    %v32 = vpop.permute.xlu0 %31
    %vm33 = vcmask 523648
    %34 = vst.msk [vmem:[#allocation0] sm:$0x1] %vm33, %v32
    %s35 = scalar_lea.vmem %s0, 2
    %v36 = vld [vmem:[%s35] sm:$0x1]
    %37 = vrot.lane.b32.xlu0 %v36, 32
    %v38 = vpop.permute.xlu0 %37
    %vm39 = vcmask 392448
    %40 = vst.msk [vmem:[#allocation0] sm:$0x1] %vm39, %v38
    %s41 = scalar_lea.vmem %s0, 1
    %v42 = vld [vmem:[%s41] sm:$0x1]
    %43 = vrot.lane.b32.xlu0 %v42, 16
    %v44 = vpop.permute.xlu0 %43
    %vm45 = vcmask 261248
    %46 = vst.msk [vmem:[#allocation0] sm:$0x1] %vm45, %v44
    %s48 = ssub.s32 2, 1
    %v49 = vld [vmem:[#allocation0] sm:%s48]
    %s51 = ssub.s32 2, 1
    %52 = vst [vmem:[%s1] sm:%s51] %v49

// kernel: tile.8
$region0: #{tile.8}
  #allocation0 [shape = 's32[1]{0}', space=sflag, size = 0x4, scoped, tag = 'scoped memory for tile.8']
  %s0 = inlined_call_operand.vmem [shape: f32[16], index: 0, kind: input, shape index: {}]
  %s1 = inlined_call_operand.vmem [shape: f32[8,16], index: 1, kind: output, shape index: {}]
  // Predicated region
  $region2: #{tile.8} parent=0 // pred_check
    _
  $region3: #{tile.8} parent=0 // pred_check_branch
    %3 = sbr.rel (0) target = $region5
  $region4: #{tile.8} parent=0 // pred_region
    _
  $region5: #{tile.8} parent=0 // pred_fallthru
    _
  %v4 = vld [vmem:[%s0] ss:$0 sm:$0xff]
  %5 = vst [vmem:[%s1] sm:$0xff] %v4

// kernel: _policy_logit_tail.1
$region0: #{_policy_logit_tail.1}
  #allocation0 [shape = 'u32[]', space=smem, size = 0x4, offset = 0x4, fixed_abs, tag = 'smem constant byte address 0x4 - core index']
  #allocation1 [shape = 'u32[72,128]{1,0:T(1,128)}', space=vmem, size = 0x9000, scoped, tag = 'internal scratch']
  %s0 = inlined_call_operand.vmem [shape: f32[1,256], index: 0, kind: input, shape index: {}]
  %s1 = inlined_call_operand.vmem [shape: f32[256,128], index: 1, kind: input, shape index: {}]
  %s2 = inlined_call_operand.vmem [shape: f32[1,128], index: 2, kind: input, shape index: {}]
  %s3 = inlined_call_operand.vmem [shape: s32[1,128], index: 3, kind: input, shape index: {}]
  %s4 = inlined_call_operand.vmem [shape: f32[1,128], index: 4, kind: output, shape index: {}]
  %s5 = sld [smem:[#allocation0]]
  $region26: #{_policy_logit_tail.1} parent=0
    _
  %s7 = ssub.s32 1, %s5
  %s8 = scalar_select 0, %s7, %s5
  // Predicated region
  $region2: #{_policy_logit_tail.1} parent=0 // pred_check
    _
  $region3: #{_policy_logit_tail.1} parent=0 // pred_check_branch
    %10 = sbr.rel (0) target = $region5
  $region4: #{_policy_logit_tail.1} parent=0 // pred_region
    _
  $region5: #{_policy_logit_tail.1} parent=0 // pred_fallthru
    _
  // Predicated region
  $region6: #{_policy_logit_tail.1} parent=0 // pred_check
    _
  $region7: #{_policy_logit_tail.1} parent=0 // pred_check_branch
    %12 = sbr.rel (0) target = $region9
  $region8: #{_policy_logit_tail.1} parent=0 // pred_region
    _
  $region9: #{_policy_logit_tail.1} parent=0 // pred_fallthru
    _
  // Predicated region
  $region10: #{_policy_logit_tail.1} parent=0 // pred_check
    _
  $region11: #{_policy_logit_tail.1} parent=0 // pred_check_branch
    %14 = sbr.rel (0) target = $region13
  $region12: #{_policy_logit_tail.1} parent=0 // pred_region
    _
  $region13: #{_policy_logit_tail.1} parent=0 // pred_fallthru
    _
  // Predicated region
  $region14: #{_policy_logit_tail.1} parent=0 // pred_check
    _
  $region15: #{_policy_logit_tail.1} parent=0 // pred_check_branch
    %16 = sbr.rel (0) target = $region17
  $region16: #{_policy_logit_tail.1} parent=0 // pred_region
    _
  $region17: #{_policy_logit_tail.1} parent=0 // pred_fallthru
    _
  %v17 = vld [vmem:[%s0] sm:$0x3]
  %v18 = vld [vmem:[%s1] sm:$0xff]
  %v19 = vld [vmem:[%s1 + $0x8] sm:$0xff]
  %v20 = vld [vmem:[%s1 + $0x10] sm:$0xff]
  %v21 = vld [vmem:[%s1 + $0x18] sm:$0xff]
  %v22 = vld [vmem:[%s1 + $0x20] sm:$0xff]
  %v23 = vld [vmem:[%s1 + $0x28] sm:$0xff]
  %v24 = vld [vmem:[%s1 + $0x30] sm:$0xff]
  %v25 = vld [vmem:[%s1 + $0x38] sm:$0xff]
  %v26 = vld [vmem:[%s1 + $0x40] sm:$0xff]
  %v27 = vld [vmem:[%s1 + $0x48] sm:$0xff]
  %v28 = vld [vmem:[%s1 + $0x50] sm:$0xff]
  %v29 = vld [vmem:[%s1 + $0x58] sm:$0xff]
  %v30 = vld [vmem:[%s1 + $0x60] sm:$0xff]
  %v31 = vld [vmem:[%s1 + $0x68] sm:$0xff]
  %v32 = vld [vmem:[%s1 + $0x70] sm:$0xff]
  %v33 = vld [vmem:[%s1 + $0x78] sm:$0xff]
  %v34 = vld [vmem:[%s1 + $0x80] sm:$0xff]
  %v35 = vld [vmem:[%s1 + $0x88] sm:$0xff]
  %v36 = vld [vmem:[%s1 + $0x90] sm:$0xff]
  %v37 = vld [vmem:[%s1 + $0x98] sm:$0xff]
  %v38 = vld [vmem:[%s1 + $0xa0] sm:$0xff]
  %v39 = vld [vmem:[%s1 + $0xa8] sm:$0xff]
  %v40 = vld [vmem:[%s1 + $0xb0] sm:$0xff]
  %v41 = vld [vmem:[%s1 + $0xb8] sm:$0xff]
  %v42 = vld [vmem:[%s1 + $0xc0] sm:$0xff]
  %v43 = vld [vmem:[%s1 + $0xc8] sm:$0xff]
  %v44 = vld [vmem:[%s1 + $0xd0] sm:$0xff]
  %v45 = vld [vmem:[%s1 + $0xd8] sm:$0xff]
  %v46 = vld [vmem:[%s1 + $0xe0] sm:$0xff]
  %v47 = vld [vmem:[%s1 + $0xe8] sm:$0xff]
  %v48 = vld [vmem:[%s1 + $0xf0] sm:$0xff]
  %v49 = vld [vmem:[%s1 + $0xf8] sm:$0xff]
  %v50 = vld [vmem:[%s2] sm:$0x1]
  %v52 = vperm.slane %v17, 0
  %v53 = vperm.slane %v17, 1
  %56 = vmatpush.msra.mxu0 %v33
  %57 = vmatpush.msra.mxu0 %v32
  %58 = vmatpush.msra.mxu0 %v31
  %59 = vmatpush.msra.mxu0 %v30
  %60 = vmatpush.msra.mxu0 %v29
  %61 = vmatpush.msra.mxu0 %v28
  %62 = vmatpush.msra.mxu0 %v27
  %63 = vmatpush.msra.mxu0 %v26
  %64 = vmatpush.msra.mxu0 %v25
  %65 = vmatpush.msra.mxu0 %v24
  %66 = vmatpush.msra.mxu0 %v23
  %67 = vmatpush.msra.mxu0 %v22
  %68 = vmatpush.msra.mxu0 %v21
  %69 = vmatpush.msra.mxu0 %v20
  %70 = vmatpush.msra.mxu0 %v19
  %71 = vmatpush.msra.mxu0 %v18
  %72 = vmatmul.f32.gmra.mxu0 %v52
  %v73 = vpop.f32.mrf.mxu0
  %v74 = vadd.f32 %v50, %v73
  %75 = vdwg.mxu0
  %76 = vmatpush.msra.mxu0 %v49
  %77 = vmatpush.msra.mxu0 %v48
  %78 = vmatpush.msra.mxu0 %v47
  %79 = vmatpush.msra.mxu0 %v46
  %80 = vmatpush.msra.mxu0 %v45
  %81 = vmatpush.msra.mxu0 %v44
  %82 = vmatpush.msra.mxu0 %v43
  %83 = vmatpush.msra.mxu0 %v42
  %84 = vmatpush.msra.mxu0 %v41
  %85 = vmatpush.msra.mxu0 %v40
  %86 = vmatpush.msra.mxu0 %v39
  %87 = vmatpush.msra.mxu0 %v38
  %88 = vmatpush.msra.mxu0 %v37
  %89 = vmatpush.msra.mxu0 %v36
  %90 = vmatpush.msra.mxu0 %v35
  %91 = vmatpush.msra.mxu0 %v34
  %92 = vmatmul.f32.gmra.mxu0 %v53
  %v93 = vpop.f32.mrf.mxu0
  %v94 = vadd.f32 %v74, %v93
  %95 = vdwg.mxu0
  %v96 = vld [vmem:[%s3] sm:$0x1]
  %vm97 = vcmp.ne.s32.totalorder %v96, 0
  %v98 = vsel %vm97, %v94, -1e+10
  %99 = vst [vmem:[%s4] sm:$0x1] %v98
  // Predicated region
  $region18: #{_policy_logit_tail.1} parent=0 // pred_check
    _
  $region19: #{_policy_logit_tail.1} parent=0 // pred_check_branch
    %101 = sbr.rel (0) target = $region21
  $region20: #{_policy_logit_tail.1} parent=0 // pred_region
    _
  $region21: #{_policy_logit_tail.1} parent=0 // pred_fallthru
    _
  // Predicated region
  $region22: #{_policy_logit_tail.1} parent=0 // pred_check
    _
  $region23: #{_policy_logit_tail.1} parent=0 // pred_check_branch
    %103 = sbr.rel (0) target = $region25
  $region24: #{_policy_logit_tail.1} parent=0 // pred_region
    _
  $region25: #{_policy_logit_tail.1} parent=0 // pred_fallthru
    _

</llo_original>
